<compile_context>
chip_gen: v7x
topology: tpu7x:2x2x1
jax: 0.10.0
libtpu: 0.0.40
codegen_flags: <defaults>
</compile_context>

<pallas_src>
import functools

import jax
import jax.numpy as jnp
from jax.experimental import pallas as pl
from jax.experimental.pallas import tpu as pltpu


def _bspline_kernel(pts_ref, ctr_ref, wT_ref, out_ref, *, inv_h, offset):
    """One lane-tile of the fused basis-eval + matmul (+ offset).

    pts_ref : (1, tile_m)         evaluation points (lane-dense)
    ctr_ref : (n_basis, 1)        knot centers, already scaled by 1/spacing
    wT_ref  : (n_funcs, n_basis)  weights, pre-transposed
    out_ref : (n_funcs, tile_m)   output^T (lane-dense)
    """
    u = pts_ref[...] * inv_h                       # (1, tm): one mul per point
    t = u - ctr_ref[...]                           # (n_basis, tm) via broadcast
    a = jnp.abs(t)
    # Branch-free cardinal cubic B-spline on uniform knots:
    #   B(a) = (max(2-a,0)^3 - 4*max(1-a,0)^3) / 6
    q2 = jnp.maximum(2.0 - a, 0.0)
    q1 = jnp.maximum(1.0 - a, 0.0)
    f_t = (q2 * q2 * q2 - 4.0 * (q1 * q1 * q1)) * (1.0 / 6.0)   # F^T (n_basis, tm)
    acc = jnp.dot(wT_ref[...], f_t, preferred_element_type=jnp.float32)  # (n_funcs, tm)
    if offset is not None:
        acc = acc + offset
    out_ref[...] = acc.astype(out_ref.dtype)


def bspline_functions_forward(points, centers, weights, offset=None, *,
                              spacing=1.0, tile_m=1024):
    """Pallas implementation of BSplineFunctions.forward (generic path).

    points : (N,) f32 evaluation points
    centers: (n_basis,) f32 uniform knot centers of the cubic B-spline basis
    weights: (n_basis, n_funcs) f32, or (n_basis,) f32 (singleton)
    offset : optional python scalar (torch `if offset:` semantics — falsy dropped)
    """
    singleton = weights.ndim == 1
    w2d = weights[:, None] if singleton else weights        # get_weights_2d()

    N = int(points.shape[0])
    n_basis = int(centers.shape[0])
    n_funcs = int(w2d.shape[1])

    inv_h = float(1.0 / spacing)
    offset_val = float(offset) if offset else None          # matches torch `if self.offset:`

    # Lane tiling: multiples of 128; shrink for small N (avoid over-padding).
    lane = 128
    tile_m = max(lane, (int(tile_m) // lane) * lane)
    if N <= tile_m:
        tile_m = max(lane, pl.cdiv(N, lane) * lane)
    n_pad = pl.cdiv(N, tile_m) * tile_m
    grid = (n_pad // tile_m,)

    # Points on the lane (last) dim; zero-pad the tail (sliced off below).
    pts_row = jnp.pad(points.astype(jnp.float32), (0, n_pad - N)).reshape(1, n_pad)
    ctr_col = (centers.astype(jnp.float32) * inv_h).reshape(n_basis, 1)  # hoisted 1/h
    w_t = jnp.asarray(w2d, jnp.float32).T                    # (n_funcs, n_basis)

    cost = pl.CostEstimate(
        flops=int(n_pad * (11 * n_basis + 2 * n_basis * n_funcs)),
        transcendentals=0,
        bytes_accessed=int(4 * (n_pad + n_basis + n_basis * n_funcs + n_funcs * n_pad)),
    )

    kernel = functools.partial(_bspline_kernel, inv_h=inv_h, offset=offset_val)

    out_t = pl.pallas_call(
        kernel,
        out_shape=jax.ShapeDtypeStruct((n_funcs, n_pad), jnp.float32),
        grid_spec=pltpu.PrefetchScalarGridSpec(
            num_scalar_prefetch=0,
            grid=grid,
            in_specs=[
                pl.BlockSpec((1, tile_m), lambda i: (0, i)),          # points tile
                pl.BlockSpec((n_basis, 1), lambda i: (0, 0)),         # centers (resident)
                pl.BlockSpec((n_funcs, n_basis), lambda i: (0, 0)),   # W^T (resident)
            ],
            out_specs=pl.BlockSpec((n_funcs, tile_m), lambda i: (0, i)),
        ),
        compiler_params=pltpu.CompilerParams(dimension_semantics=("parallel",)),
        cost_estimate=cost,
    )(pts_row, ctr_col, w_t)

    if singleton:
        return out_t[0, :N]                                  # maybe_flatten()
    return out_t[:, :N].T                                    # (N, n_funcs)


def _reference_forward(points, centers, weights, offset=None, *, spacing=1.0):
    """Pure-JAX reference mirroring the PyTorch einsum path."""
    w2d = weights[:, None] if weights.ndim == 1 else weights
    t = (points[:, None] - centers[None, :]) / spacing
    a = jnp.abs(t)
    F = jnp.where(a < 1.0, 2.0 / 3.0 - a * a + 0.5 * a ** 3,
                  jnp.where(a < 2.0, ((2.0 - a) ** 3) / 6.0, 0.0))
    out = jnp.einsum("xb,bf->xf", F, w2d)
    if weights.ndim == 1:
        out = out[:, 0]
    if offset:
        out = out + offset
    return out


if __name__ == "__main__":
    key = jax.random.PRNGKey(0)
    k_pts, k_w, k_w1 = jax.random.split(key, 3)

    # 2048 evaluation points, 32 cubic B-spline basis functions on a uniform
    # knot grid (spacing 0.5), 8 output functions.
    N, n_basis, n_funcs = 2048, 32, 8
    spacing = 0.5
    centers = jnp.arange(n_basis, dtype=jnp.float32) * spacing
    points = jax.random.uniform(k_pts, (N,), jnp.float32) * (n_basis - 1) * spacing
    weights = jax.random.normal(k_w, (n_basis, n_funcs), jnp.float32)
    offset = 0.5

    out = jax.block_until_ready(
        bspline_functions_forward(points, centers, weights, offset, spacing=spacing))
    ref = _reference_forward(points, centers, weights, offset, spacing=spacing)
    assert out.shape == (N, n_funcs)
    assert jnp.allclose(out, ref, atol=1e-5, rtol=1e-5), "mismatch vs reference (2D weights)"

    # Singleton-weights path (is_singleton / maybe_flatten), non-multiple-of-tile N.
    N2 = 1000
    points2 = jax.random.uniform(k_pts, (N2,), jnp.float32) * (n_basis - 1) * spacing
    w1 = jax.random.normal(k_w1, (n_basis,), jnp.float32)
    out1 = jax.block_until_ready(
        bspline_functions_forward(points2, centers, w1, None, spacing=spacing))
    ref1 = _reference_forward(points2, centers, w1, None, spacing=spacing)
    assert out1.shape == (N2,)
    assert jnp.allclose(out1, ref1, atol=1e-5, rtol=1e-5), "mismatch vs reference (singleton)"

    # TODO(synk): TensorGrid/TensorBasis separable path ('xf,fgF,yg->xyF') and the
    # derivative/gradient/laplacian/hessian methods are not implemented here; only
    # forward() for plain point inputs.
    print("KERNEL_OK")
</pallas_src>

<mosaic_0001>
module attributes {stable_mosaic.version = 11 : i64} {
  func.func @_bspline_kernel(%arg0: i32, %arg1: memref<1x1024xf32, #tpu.memory_space<vmem>>, %arg2: memref<32x1xf32, #tpu.memory_space<vmem>>, %arg3: memref<8x32xf32, #tpu.memory_space<vmem>>, %arg4: memref<8x1024xf32, #tpu.memory_space<vmem>>) attributes {dimension_semantics = [#tpu.dimension_semantics<parallel>], iteration_bounds = array<i64: 2>, scalar_prefetch = 0 : i64, scratch_operands = 0 : i64, tpu.core_type = #tpu.core_type<tc>, window_params = [{transform_indices = @transform_0, window_bounds = array<i64: 1, 1024>}, {pipeline_mode = #tpu.pipeline_mode<synchronous>, transform_indices = @transform_1, window_bounds = array<i64: 32, 1>}, {pipeline_mode = #tpu.pipeline_mode<synchronous>, transform_indices = @transform_2, window_bounds = array<i64: 8, 32>}, {transform_indices = @transform_3, window_bounds = array<i64: 8, 1024>}]} {
    %c0 = arith.constant 0 : index
    %c0_0 = arith.constant 0 : index
    %0 = vector.load %arg1[%c0, %c0_0] : memref<1x1024xf32, #tpu.memory_space<vmem>>, vector<1x1024xf32>
    %cst = arith.constant 2.000000e+00 : f32
    %1 = vector.broadcast %cst : f32 to vector<1x1024xf32>
    %2 = arith.mulf %0, %1 : vector<1x1024xf32>
    %c0_1 = arith.constant 0 : index
    %c0_2 = arith.constant 0 : index
    %3 = vector.load %arg2[%c0_1, %c0_2] : memref<32x1xf32, #tpu.memory_space<vmem>>, vector<32x1xf32>
    %4 = vector.broadcast %2 : vector<1x1024xf32> to vector<32x1024xf32>
    %5 = vector.broadcast %3 : vector<32x1xf32> to vector<32x1024xf32>
    %6 = arith.subf %4, %5 : vector<32x1024xf32>
    %7 = math.absf %6 : vector<32x1024xf32>
    %cst_3 = arith.constant 2.000000e+00 : f32
    %8 = vector.broadcast %cst_3 : f32 to vector<32x1024xf32>
    %9 = arith.subf %8, %7 : vector<32x1024xf32>
    %cst_4 = arith.constant 0.000000e+00 : f32
    %10 = vector.broadcast %cst_4 : f32 to vector<32x1024xf32>
    %11 = arith.maximumf %9, %10 : vector<32x1024xf32>
    %cst_5 = arith.constant 1.000000e+00 : f32
    %12 = vector.broadcast %cst_5 : f32 to vector<32x1024xf32>
    %13 = arith.subf %12, %7 : vector<32x1024xf32>
    %cst_6 = arith.constant 0.000000e+00 : f32
    %14 = vector.broadcast %cst_6 : f32 to vector<32x1024xf32>
    %15 = arith.maximumf %13, %14 : vector<32x1024xf32>
    %16 = arith.mulf %11, %11 : vector<32x1024xf32>
    %17 = arith.mulf %16, %11 : vector<32x1024xf32>
    %18 = arith.mulf %15, %15 : vector<32x1024xf32>
    %19 = arith.mulf %18, %15 : vector<32x1024xf32>
    %cst_7 = arith.constant 4.000000e+00 : f32
    %20 = vector.broadcast %cst_7 : f32 to vector<32x1024xf32>
    %21 = arith.mulf %20, %19 : vector<32x1024xf32>
    %22 = arith.subf %17, %21 : vector<32x1024xf32>
    %cst_8 = arith.constant 0.166666672 : f32
    %23 = vector.broadcast %cst_8 : f32 to vector<32x1024xf32>
    %24 = arith.mulf %22, %23 : vector<32x1024xf32>
    %c0_9 = arith.constant 0 : index
    %c0_10 = arith.constant 0 : index
    %25 = vector.load %arg3[%c0_9, %c0_10] : memref<8x32xf32, #tpu.memory_space<vmem>>, vector<8x32xf32>
    %cst_11 = arith.constant dense<0.000000e+00> : vector<8x1024xf32>
    %26 = tpu.matmul %25, %24, %cst_11 {dimension_numbers = #tpu.dot_dimension_numbers<[1], [0], [0], [1], [0, 0, 1, 1], [], []>} : vector<8x32xf32>, vector<32x1024xf32>, vector<8x1024xf32> -> vector<8x1024xf32>
    %cst_12 = arith.constant 5.000000e-01 : f32
    %27 = vector.broadcast %cst_12 : f32 to vector<8x1024xf32>
    %28 = arith.addf %26, %27 : vector<8x1024xf32>
    %c0_13 = arith.constant 0 : index
    %c0_14 = arith.constant 0 : index
    %29 = vector.load %arg4[%c0_13, %c0_14] : memref<8x1024xf32, #tpu.memory_space<vmem>>, vector<8x1024xf32>
    tpu.vector_store %arg4[%c0_13, %c0_14], %28 {strides = array<i32>} : memref<8x1024xf32, #tpu.memory_space<vmem>>, vector<8x1024xf32>,
    return
  }
  func.func @transform_0(%arg0: i32) -> (i32, i32) {
    %c0_i32 = arith.constant 0 : i32
    %c0_i32_0 = arith.constant 0 : i32
    return %c0_i32, %arg0 : i32, i32
  }
  func.func @transform_1(%arg0: i32) -> (i32, i32) {
    %c0_i32 = arith.constant 0 : i32
    %c0_i32_0 = arith.constant 0 : i32
    %c0_i32_1 = arith.constant 0 : i32
    return %c0_i32, %c0_i32_0 : i32, i32
  }
  func.func @transform_2(%arg0: i32) -> (i32, i32) {
    %c0_i32 = arith.constant 0 : i32
    %c0_i32_0 = arith.constant 0 : i32
    %c0_i32_1 = arith.constant 0 : i32
    return %c0_i32, %c0_i32_0 : i32, i32
  }
  func.func @transform_3(%arg0: i32) -> (i32, i32) {
    %c0_i32 = arith.constant 0 : i32
    %c0_i32_0 = arith.constant 0 : i32
    return %c0_i32, %arg0 : i32, i32
  }
}

</mosaic_0001>

<llo_original>
// kernel: tpu_custom_call.1
$region0: #{tpu_custom_call.1}
  #allocation0 [shape = 'u32[]', space=smem, size = 0x4, offset = 0x4, fixed_abs, tag = 'smem constant byte address 0x4 - core index']
  #allocation1 [shape = 'u32[144,128]{1,0:T(1,128)}', space=vmem, size = 0x12000, scoped, tag = 'internal scratch']
  %s0 = inlined_call_operand.vmem [shape: f32[1,2048], index: 0, kind: input, shape index: {}]
  %s1 = inlined_call_operand.vmem [shape: f32[32,1], index: 1, kind: input, shape index: {}]
  %s2 = inlined_call_operand.vmem [shape: f32[8,32], index: 2, kind: input, shape index: {}]
  %s3 = inlined_call_operand.hbm [shape: f32[8,2048], index: 3, kind: output, shape index: {}]
  %s4 = sld [smem:[#allocation0]]
  $region45: #{tpu_custom_call.1} parent=0
    _
  %s6 = ssub.s32 1, %s4
  %s7 = scalar_select 0, %s6, %s4
  $region1: #{tpu_custom_call.1} parent=0
    #allocation2 [shape = 'u8[65536]{0}', space=vmem, size = 0x10000, scoped, tag = 'output window, operand 0']
    #allocation3 [shape = 's32[2]{0}', space=sflag, size = 0x8, scoped, tag = 'scoped memory for tpu_custom_call.1']
    %8 = vsyncpa [#allocation3], 0
    %s9 = scalar_lea.sflag [#allocation3], 1
    %10 = vsyncpa %s9, 0
    loop: start=0, step=1, limit=4
    $region2: #{tpu_custom_call.1} parent=1 // loop_pre_header
      _
    $region3: #{tpu_custom_call.1} parent=1 // loop_header
      %s12 = sphi 0, %s16
      %p13 = scmp.ge.s32.totalorder %s12, 4
      %s22 = sphi 0, %s24
      %s25 = sphi 0, %s22
      %s26 = sphi 0, %s25
      %s42 = sphi 0, %s26
      %s46 = sphi 0, %s46
      %s48 = sphi 0, %s46
      %s49 = sphi 0, %s48
      %s63 = sphi 0, %s49
      %s67 = sphi 0, %s67
      %s69 = sphi 0, %s67
      %s70 = sphi 0, %s69
      %s84 = sphi 0, %s70
      %s90 = sphi 0, %s92
      %s93 = sphi 0, %s90
      %s94 = sphi 0, %s93
      %s110 = sphi 0, %s94
    $region4: #{tpu_custom_call.1} parent=1 // loop_header_branch
      %15 = sbr.rel (%p13) target = $region8
    $region5: #{tpu_custom_call.1} parent=1 // loop_body
      %s17 = ssub.s32 %s12, 1
      %s18 = ssub.s32 %s12, 2
      %s19 = sadd.s32 %s12, 1
      %s20 = ssub.s32 %s12, %s19
      %p21 = scmp.eq.s32.totalorder %s20, 0
      %s23 = sadd.s32 %s22, 1
      %s24 = scalar_select %p21, %s22, %s23
      %p27 = pneg %p21
      %p28 = scmp.eq.s32.totalorder %s12, 1
      %p29 = por %p27, %p28
      %p30 = scmp.ne.s32.totalorder %s22, %s25
      %p31 = scmp.eq.s32.totalorder %s12, 0
      %p32 = por %p30, %p31
      %p33 = scmp.ne.s32.totalorder %s22, %s25
      %p34 = scmp.eq.s32.totalorder %s17, 1
      %p35 = por %p33, %p34
      %p36 = scmp.ne.s32.totalorder %s25, %s26
      %p37 = scmp.eq.s32.totalorder %s17, 0
      %p38 = por %p36, %p37
      %p39 = scmp.ne.s32.totalorder %s25, %s26
      %p40 = scmp.eq.s32.totalorder %s18, 1
      %p41 = por %p39, %p40
      %p43 = scmp.ne.s32.totalorder %s26, %s42
      %p44 = scmp.eq.s32.totalorder %s18, 0
      %p45 = por %p43, %p44
      %s47 = sadd.s32 %s46, 1
      %p50 = scmp.eq.s32.totalorder %s12, 1
      %p51 = scmp.ne.s32.totalorder %s46, %s48
      %p52 = scmp.eq.s32.totalorder %s12, 0
      %p53 = por %p51, %p52
      %p54 = scmp.ne.s32.totalorder %s46, %s48
      %p55 = scmp.eq.s32.totalorder %s17, 1
      %p56 = por %p54, %p55
      %p57 = scmp.ne.s32.totalorder %s48, %s49
      %p58 = scmp.eq.s32.totalorder %s17, 0
      %p59 = por %p57, %p58
      %p60 = scmp.ne.s32.totalorder %s48, %s49
      %p61 = scmp.eq.s32.totalorder %s18, 1
      %p62 = por %p60, %p61
      %p64 = scmp.ne.s32.totalorder %s49, %s63
      %p65 = scmp.eq.s32.totalorder %s18, 0
      %p66 = por %p64, %p65
      %s68 = sadd.s32 %s67, 1
      %p71 = scmp.eq.s32.totalorder %s12, 1
      %p72 = scmp.ne.s32.totalorder %s67, %s69
      %p73 = scmp.eq.s32.totalorder %s12, 0
      %p74 = por %p72, %p73
      %p75 = scmp.ne.s32.totalorder %s67, %s69
      %p76 = scmp.eq.s32.totalorder %s17, 1
      %p77 = por %p75, %p76
      %p78 = scmp.ne.s32.totalorder %s69, %s70
      %p79 = scmp.eq.s32.totalorder %s17, 0
      %p80 = por %p78, %p79
      %p81 = scmp.ne.s32.totalorder %s69, %s70
      %p82 = scmp.eq.s32.totalorder %s18, 1
      %p83 = por %p81, %p82
      %p85 = scmp.ne.s32.totalorder %s70, %s84
      %p86 = scmp.eq.s32.totalorder %s18, 0
      %p87 = por %p85, %p86
      %s88 = ssub.s32 %s12, %s19
      %p89 = scmp.eq.s32.totalorder %s88, 0
      %s91 = sadd.s32 %s90, 1
      %s92 = scalar_select %p89, %s90, %s91
      %p95 = pneg %p89
      %p96 = scmp.eq.s32.totalorder %s12, 1
      %p97 = por %p95, %p96
      %p98 = scmp.ne.s32.totalorder %s90, %s93
      %p99 = scmp.eq.s32.totalorder %s12, 0
      %p100 = por %p98, %p99
      %p101 = scmp.ne.s32.totalorder %s90, %s93
      %p102 = scmp.eq.s32.totalorder %s17, 1
      %p103 = por %p101, %p102
      %p104 = scmp.ne.s32.totalorder %s93, %s94
      %p105 = scmp.eq.s32.totalorder %s17, 0
      %p106 = por %p104, %p105
      %p107 = scmp.ne.s32.totalorder %s93, %s94
      %p108 = scmp.eq.s32.totalorder %s18, 1
      %p109 = por %p107, %p108
      %p111 = scmp.ne.s32.totalorder %s94, %s110
      %p112 = scmp.eq.s32.totalorder %s18, 0
      %p113 = por %p111, %p112
      %p114 = scmp.le.s32.totalorder 1, %s12
      %p115 = scmp.lt.s32.totalorder %s12, 3
      %p116 = pnand %p114, %p115
      %p117 = pneg %p116
      // Predicated region
      $region9: #{tpu_custom_call.1} parent=5 // pred_check
        _
      $region10: #{tpu_custom_call.1} parent=5 // pred_check_branch
        %119 = sbr.rel (%p116) target = $region12
      $region11: #{tpu_custom_call.1} parent=5 // pred_region
        %s120 = ssub.s32 %s12, 1
        // Predicated region
        $region13: #{tpu_custom_call.1} parent=11 // pred_check
          %p121 = pneg %p59
        $region14: #{tpu_custom_call.1} parent=11 // pred_check_branch
          %123 = sbr.rel (%p121) target = $region16
        $region15: #{tpu_custom_call.1} parent=11 // pred_region
          _
        $region16: #{tpu_custom_call.1} parent=11 // pred_fallthru
          _
        // Predicated region
        $region17: #{tpu_custom_call.1} parent=11 // pred_check
          %p124 = pneg %p80
        $region18: #{tpu_custom_call.1} parent=11 // pred_check_branch
          %126 = sbr.rel (%p124) target = $region20
        $region19: #{tpu_custom_call.1} parent=11 // pred_region
          _
        $region20: #{tpu_custom_call.1} parent=11 // pred_fallthru
          _
      $region12: #{tpu_custom_call.1} parent=5 // pred_fallthru
        _
      %p127 = scmp.lt.s32.totalorder %s12, 2
      // Predicated region
      $region21: #{tpu_custom_call.1} parent=5 // pred_check
        %p128 = pneg %p127
      $region22: #{tpu_custom_call.1} parent=5 // pred_check_branch
        %130 = sbr.rel (%p128) target = $region24
      $region23: #{tpu_custom_call.1} parent=5 // pred_region
        // Predicated region
        $region25: #{tpu_custom_call.1} parent=23 // pred_check
          %p131 = pneg %p32
        $region26: #{tpu_custom_call.1} parent=23 // pred_check_branch
          %133 = sbr.rel (%p131) target = $region28
        $region27: #{tpu_custom_call.1} parent=23 // pred_region
          %s134 = smul.u32 8, %s12
          %p135 = scmp.lt.s32.totalorder %s134, 15
          %s136 = scalar_select %p135, %s134, 15
          %s137 = scalar_lea.vmem %s0, %s136
          %s138 = smul.u32 8, %s12
        $region28: #{tpu_custom_call.1} parent=23 // pred_fallthru
          _
      $region24: #{tpu_custom_call.1} parent=5 // pred_fallthru
        _
      %p139 = scmp.le.s32.totalorder 1, %s12
      %p140 = scmp.lt.s32.totalorder %s12, 3
      %p141 = pnand %p139, %p140
      %p142 = pneg %p141
      // Predicated region
      $region29: #{tpu_custom_call.1} parent=5 // pred_check
        _
      $region30: #{tpu_custom_call.1} parent=5 // pred_check_branch
        %144 = sbr.rel (%p141) target = $region32
      $region31: #{tpu_custom_call.1} parent=5 // pred_region
        %s145 = ssub.s32 %s12, 1
        %s146 = smul.u32 8, %s17
        %p147 = scmp.lt.s32.totalorder %s146, 15
        %s148 = scalar_select %p147, %s146, 15
        %s149 = scalar_lea.vmem %s0, %s148
        %p150 = pneg %p38
        %p151 = pneg %p35
        %p152 = pneg %p59
        %p153 = pneg %p56
        %p154 = pneg %p80
        %p155 = pneg %p77
        %p156 = pneg %p106
        %p157 = pneg %p103
        %s158 = sand.u32 %s93, 1
        %s159 = scalar_lea.sflag [#allocation3], %s158
        %s160 = sand.u32 %s93, 1
        %s161 = smul.addr %s160, 64
        %s162 = scalar_lea.vmem [#allocation2], %s161
        %s163 = smul.u32 8, %s17
        %p164 = scmp.lt.s32.totalorder %s163, 15
        %s165 = scalar_select %p164, %s163, 15
        %s166 = scalar_lea.vmem %s0, %s165
        %s167 = smul.u32 8, %s17
        %s168 = smul.u32 8, %s17
        %v169 = vld [vmem:[%s166] sm:$0xff]
        %v170 = vmul.f32 %v169, 2.0
        %v171 = vld [vmem:[%s1] sm:$0xff]
        %v172 = vld [vmem:[%s1 + $0x8] sm:$0xff]
        %v173 = vld [vmem:[%s1 + $0x10] sm:$0xff]
        %v174 = vld [vmem:[%s1 + $0x18] sm:$0xff]
        %v176 = vlaneseq
        %v177 = vshrl.u32 %v176, 7
        %v178 = vsub.s32 0, %v177
        %v179 = vrot.slane %v170, %v178
        %v180 = vlaneseq
        %v181 = vshrl.u32 %v180, 7
        %v182 = vsub.s32 1, %v181
        %v183 = vrot.slane %v170, %v182
        %v184 = vlaneseq
        %v185 = vshrl.u32 %v184, 7
        %v186 = vsub.s32 2, %v185
        %v187 = vrot.slane %v170, %v186
        %v188 = vlaneseq
        %v189 = vshrl.u32 %v188, 7
        %v190 = vsub.s32 3, %v189
        %v191 = vrot.slane %v170, %v190
        %v192 = vlaneseq
        %v193 = vshrl.u32 %v192, 7
        %v194 = vsub.s32 4, %v193
        %v195 = vrot.slane %v170, %v194
        %v196 = vlaneseq
        %v197 = vshrl.u32 %v196, 7
        %v198 = vsub.s32 5, %v197
        %v199 = vrot.slane %v170, %v198
        %v200 = vlaneseq
        %v201 = vshrl.u32 %v200, 7
        %v202 = vsub.s32 6, %v201
        %v203 = vrot.slane %v170, %v202
        %v204 = vlaneseq
        %v205 = vshrl.u32 %v204, 7
        %v206 = vsub.s32 7, %v205
        %v207 = vrot.slane %v170, %v206
        %217 = vset.pattern.permute.xlu0 0
        %218 = vperm.xlu0 %217, %v171
        %v219 = vpop.permute.xlu0 %218
        %222 = vset.pattern.permute.xlu0 0
        %223 = vperm.xlu0 %222, %v172
        %v224 = vpop.permute.xlu0 %223
        %227 = vset.pattern.permute.xlu0 0
        %228 = vperm.xlu0 %227, %v173
        %v229 = vpop.permute.xlu0 %228
        %232 = vset.pattern.permute.xlu0 0
        %233 = vperm.xlu0 %232, %v174
        %v234 = vpop.permute.xlu0 %233
        %v236 = vsub.f32 %v179, %v219
        %v237 = vsub.f32 %v183, %v219
        %v238 = vsub.f32 %v187, %v219
        %v239 = vsub.f32 %v191, %v219
        %v240 = vsub.f32 %v195, %v219
        %v241 = vsub.f32 %v199, %v219
        %v242 = vsub.f32 %v203, %v219
        %v243 = vsub.f32 %v207, %v219
        %v244 = vsub.f32 %v179, %v224
        %v245 = vsub.f32 %v183, %v224
        %v246 = vsub.f32 %v187, %v224
        %v247 = vsub.f32 %v191, %v224
        %v248 = vsub.f32 %v195, %v224
        %v249 = vsub.f32 %v199, %v224
        %v250 = vsub.f32 %v203, %v224
        %v251 = vsub.f32 %v207, %v224
        %v252 = vsub.f32 %v179, %v229
        %v253 = vsub.f32 %v183, %v229
        %v254 = vsub.f32 %v187, %v229
        %v255 = vsub.f32 %v191, %v229
        %v256 = vsub.f32 %v195, %v229
        %v257 = vsub.f32 %v199, %v229
        %v258 = vsub.f32 %v203, %v229
        %v259 = vsub.f32 %v207, %v229
        %v260 = vsub.f32 %v179, %v234
        %v261 = vsub.f32 %v183, %v234
        %v262 = vsub.f32 %v187, %v234
        %v263 = vsub.f32 %v191, %v234
        %v264 = vsub.f32 %v195, %v234
        %v265 = vsub.f32 %v199, %v234
        %v266 = vsub.f32 %v203, %v234
        %v267 = vsub.f32 %v207, %v234
        %v268 = vand.u32 2147483647, %v236
        %v269 = vand.u32 2147483647, %v237
        %v270 = vand.u32 2147483647, %v238
        %v271 = vand.u32 2147483647, %v239
        %v272 = vand.u32 2147483647, %v240
        %v273 = vand.u32 2147483647, %v241
        %v274 = vand.u32 2147483647, %v242
        %v275 = vand.u32 2147483647, %v243
        %v276 = vand.u32 2147483647, %v244
        %v277 = vand.u32 2147483647, %v245
        %v278 = vand.u32 2147483647, %v246
        %v279 = vand.u32 2147483647, %v247
        %v280 = vand.u32 2147483647, %v248
        %v281 = vand.u32 2147483647, %v249
        %v282 = vand.u32 2147483647, %v250
        %v283 = vand.u32 2147483647, %v251
        %v284 = vand.u32 2147483647, %v252
        %v285 = vand.u32 2147483647, %v253
        %v286 = vand.u32 2147483647, %v254
        %v287 = vand.u32 2147483647, %v255
        %v288 = vand.u32 2147483647, %v256
        %v289 = vand.u32 2147483647, %v257
        %v290 = vand.u32 2147483647, %v258
        %v291 = vand.u32 2147483647, %v259
        %v292 = vand.u32 2147483647, %v260
        %v293 = vand.u32 2147483647, %v261
        %v294 = vand.u32 2147483647, %v262
        %v295 = vand.u32 2147483647, %v263
        %v296 = vand.u32 2147483647, %v264
        %v297 = vand.u32 2147483647, %v265
        %v298 = vand.u32 2147483647, %v266
        %v299 = vand.u32 2147483647, %v267
        %v300 = vsub.f32 2.0, %v268
        %v301 = vsub.f32 2.0, %v269
        %v302 = vsub.f32 2.0, %v270
        %v303 = vsub.f32 2.0, %v271
        %v304 = vsub.f32 2.0, %v272
        %v305 = vsub.f32 2.0, %v273
        %v306 = vsub.f32 2.0, %v274
        %v307 = vsub.f32 2.0, %v275
        %v308 = vsub.f32 2.0, %v276
        %v309 = vsub.f32 2.0, %v277
        %v310 = vsub.f32 2.0, %v278
        %v311 = vsub.f32 2.0, %v279
        %v312 = vsub.f32 2.0, %v280
        %v313 = vsub.f32 2.0, %v281
        %v314 = vsub.f32 2.0, %v282
        %v315 = vsub.f32 2.0, %v283
        %v316 = vsub.f32 2.0, %v284
        %v317 = vsub.f32 2.0, %v285
        %v318 = vsub.f32 2.0, %v286
        %v319 = vsub.f32 2.0, %v287
        %v320 = vsub.f32 2.0, %v288
        %v321 = vsub.f32 2.0, %v289
        %v322 = vsub.f32 2.0, %v290
        %v323 = vsub.f32 2.0, %v291
        %v324 = vsub.f32 2.0, %v292
        %v325 = vsub.f32 2.0, %v293
        %v326 = vsub.f32 2.0, %v294
        %v327 = vsub.f32 2.0, %v295
        %v328 = vsub.f32 2.0, %v296
        %v329 = vsub.f32 2.0, %v297
        %v330 = vsub.f32 2.0, %v298
        %v331 = vsub.f32 2.0, %v299
        %v332 = vmax.f32 %v300, 0.0
        %v333 = vmax.f32 %v301, 0.0
        %v334 = vmax.f32 %v302, 0.0
        %v335 = vmax.f32 %v303, 0.0
        %v336 = vmax.f32 %v304, 0.0
        %v337 = vmax.f32 %v305, 0.0
        %v338 = vmax.f32 %v306, 0.0
        %v339 = vmax.f32 %v307, 0.0
        %v340 = vmax.f32 %v308, 0.0
        %v341 = vmax.f32 %v309, 0.0
        %v342 = vmax.f32 %v310, 0.0
        %v343 = vmax.f32 %v311, 0.0
        %v344 = vmax.f32 %v312, 0.0
        %v345 = vmax.f32 %v313, 0.0
        %v346 = vmax.f32 %v314, 0.0
        %v347 = vmax.f32 %v315, 0.0
        %v348 = vmax.f32 %v316, 0.0
        %v349 = vmax.f32 %v317, 0.0
        %v350 = vmax.f32 %v318, 0.0
        %v351 = vmax.f32 %v319, 0.0
        %v352 = vmax.f32 %v320, 0.0
        %v353 = vmax.f32 %v321, 0.0
        %v354 = vmax.f32 %v322, 0.0
        %v355 = vmax.f32 %v323, 0.0
        %v356 = vmax.f32 %v324, 0.0
        %v357 = vmax.f32 %v325, 0.0
        %v358 = vmax.f32 %v326, 0.0
        %v359 = vmax.f32 %v327, 0.0
        %v360 = vmax.f32 %v328, 0.0
        %v361 = vmax.f32 %v329, 0.0
        %v362 = vmax.f32 %v330, 0.0
        %v363 = vmax.f32 %v331, 0.0
        %v364 = vsub.f32 1.0, %v268
        %v365 = vsub.f32 1.0, %v269
        %v366 = vsub.f32 1.0, %v270
        %v367 = vsub.f32 1.0, %v271
        %v368 = vsub.f32 1.0, %v272
        %v369 = vsub.f32 1.0, %v273
        %v370 = vsub.f32 1.0, %v274
        %v371 = vsub.f32 1.0, %v275
        %v372 = vsub.f32 1.0, %v276
        %v373 = vsub.f32 1.0, %v277
        %v374 = vsub.f32 1.0, %v278
        %v375 = vsub.f32 1.0, %v279
        %v376 = vsub.f32 1.0, %v280
        %v377 = vsub.f32 1.0, %v281
        %v378 = vsub.f32 1.0, %v282
        %v379 = vsub.f32 1.0, %v283
        %v380 = vsub.f32 1.0, %v284
        %v381 = vsub.f32 1.0, %v285
        %v382 = vsub.f32 1.0, %v286
        %v383 = vsub.f32 1.0, %v287
        %v384 = vsub.f32 1.0, %v288
        %v385 = vsub.f32 1.0, %v289
        %v386 = vsub.f32 1.0, %v290
        %v387 = vsub.f32 1.0, %v291
        %v388 = vsub.f32 1.0, %v292
        %v389 = vsub.f32 1.0, %v293
        %v390 = vsub.f32 1.0, %v294
        %v391 = vsub.f32 1.0, %v295
        %v392 = vsub.f32 1.0, %v296
        %v393 = vsub.f32 1.0, %v297
        %v394 = vsub.f32 1.0, %v298
        %v395 = vsub.f32 1.0, %v299
        %v396 = vmax.f32 %v364, 0.0
        %v397 = vmax.f32 %v365, 0.0
        %v398 = vmax.f32 %v366, 0.0
        %v399 = vmax.f32 %v367, 0.0
        %v400 = vmax.f32 %v368, 0.0
        %v401 = vmax.f32 %v369, 0.0
        %v402 = vmax.f32 %v370, 0.0
        %v403 = vmax.f32 %v371, 0.0
        %v404 = vmax.f32 %v372, 0.0
        %v405 = vmax.f32 %v373, 0.0
        %v406 = vmax.f32 %v374, 0.0
        %v407 = vmax.f32 %v375, 0.0
        %v408 = vmax.f32 %v376, 0.0
        %v409 = vmax.f32 %v377, 0.0
        %v410 = vmax.f32 %v378, 0.0
        %v411 = vmax.f32 %v379, 0.0
        %v412 = vmax.f32 %v380, 0.0
        %v413 = vmax.f32 %v381, 0.0
        %v414 = vmax.f32 %v382, 0.0
        %v415 = vmax.f32 %v383, 0.0
        %v416 = vmax.f32 %v384, 0.0
        %v417 = vmax.f32 %v385, 0.0
        %v418 = vmax.f32 %v386, 0.0
        %v419 = vmax.f32 %v387, 0.0
        %v420 = vmax.f32 %v388, 0.0
        %v421 = vmax.f32 %v389, 0.0
        %v422 = vmax.f32 %v390, 0.0
        %v423 = vmax.f32 %v391, 0.0
        %v424 = vmax.f32 %v392, 0.0
        %v425 = vmax.f32 %v393, 0.0
        %v426 = vmax.f32 %v394, 0.0
        %v427 = vmax.f32 %v395, 0.0
        %v428 = vmul.f32 %v332, %v332
        %v429 = vmul.f32 %v333, %v333
        %v430 = vmul.f32 %v334, %v334
        %v431 = vmul.f32 %v335, %v335
        %v432 = vmul.f32 %v336, %v336
        %v433 = vmul.f32 %v337, %v337
        %v434 = vmul.f32 %v338, %v338
        %v435 = vmul.f32 %v339, %v339
        %v436 = vmul.f32 %v340, %v340
        %v437 = vmul.f32 %v341, %v341
        %v438 = vmul.f32 %v342, %v342
        %v439 = vmul.f32 %v343, %v343
        %v440 = vmul.f32 %v344, %v344
        %v441 = vmul.f32 %v345, %v345
        %v442 = vmul.f32 %v346, %v346
        %v443 = vmul.f32 %v347, %v347
        %v444 = vmul.f32 %v348, %v348
        %v445 = vmul.f32 %v349, %v349
        %v446 = vmul.f32 %v350, %v350
        %v447 = vmul.f32 %v351, %v351
        %v448 = vmul.f32 %v352, %v352
        %v449 = vmul.f32 %v353, %v353
        %v450 = vmul.f32 %v354, %v354
        %v451 = vmul.f32 %v355, %v355
        %v452 = vmul.f32 %v356, %v356
        %v453 = vmul.f32 %v357, %v357
        %v454 = vmul.f32 %v358, %v358
        %v455 = vmul.f32 %v359, %v359
        %v456 = vmul.f32 %v360, %v360
        %v457 = vmul.f32 %v361, %v361
        %v458 = vmul.f32 %v362, %v362
        %v459 = vmul.f32 %v363, %v363
        %v460 = vmul.f32 %v428, %v332
        %v461 = vmul.f32 %v429, %v333
        %v462 = vmul.f32 %v430, %v334
        %v463 = vmul.f32 %v431, %v335
        %v464 = vmul.f32 %v432, %v336
        %v465 = vmul.f32 %v433, %v337
        %v466 = vmul.f32 %v434, %v338
        %v467 = vmul.f32 %v435, %v339
        %v468 = vmul.f32 %v436, %v340
        %v469 = vmul.f32 %v437, %v341
        %v470 = vmul.f32 %v438, %v342
        %v471 = vmul.f32 %v439, %v343
        %v472 = vmul.f32 %v440, %v344
        %v473 = vmul.f32 %v441, %v345
        %v474 = vmul.f32 %v442, %v346
        %v475 = vmul.f32 %v443, %v347
        %v476 = vmul.f32 %v444, %v348
        %v477 = vmul.f32 %v445, %v349
        %v478 = vmul.f32 %v446, %v350
        %v479 = vmul.f32 %v447, %v351
        %v480 = vmul.f32 %v448, %v352
        %v481 = vmul.f32 %v449, %v353
        %v482 = vmul.f32 %v450, %v354
        %v483 = vmul.f32 %v451, %v355
        %v484 = vmul.f32 %v452, %v356
        %v485 = vmul.f32 %v453, %v357
        %v486 = vmul.f32 %v454, %v358
        %v487 = vmul.f32 %v455, %v359
        %v488 = vmul.f32 %v456, %v360
        %v489 = vmul.f32 %v457, %v361
        %v490 = vmul.f32 %v458, %v362
        %v491 = vmul.f32 %v459, %v363
        %v492 = vmul.f32 %v396, %v396
        %v493 = vmul.f32 %v397, %v397
        %v494 = vmul.f32 %v398, %v398
        %v495 = vmul.f32 %v399, %v399
        %v496 = vmul.f32 %v400, %v400
        %v497 = vmul.f32 %v401, %v401
        %v498 = vmul.f32 %v402, %v402
        %v499 = vmul.f32 %v403, %v403
        %v500 = vmul.f32 %v404, %v404
        %v501 = vmul.f32 %v405, %v405
        %v502 = vmul.f32 %v406, %v406
        %v503 = vmul.f32 %v407, %v407
        %v504 = vmul.f32 %v408, %v408
        %v505 = vmul.f32 %v409, %v409
        %v506 = vmul.f32 %v410, %v410
        %v507 = vmul.f32 %v411, %v411
        %v508 = vmul.f32 %v412, %v412
        %v509 = vmul.f32 %v413, %v413
        %v510 = vmul.f32 %v414, %v414
        %v511 = vmul.f32 %v415, %v415
        %v512 = vmul.f32 %v416, %v416
        %v513 = vmul.f32 %v417, %v417
        %v514 = vmul.f32 %v418, %v418
        %v515 = vmul.f32 %v419, %v419
        %v516 = vmul.f32 %v420, %v420
        %v517 = vmul.f32 %v421, %v421
        %v518 = vmul.f32 %v422, %v422
        %v519 = vmul.f32 %v423, %v423
        %v520 = vmul.f32 %v424, %v424
        %v521 = vmul.f32 %v425, %v425
        %v522 = vmul.f32 %v426, %v426
        %v523 = vmul.f32 %v427, %v427
        %v524 = vmul.f32 %v492, %v396
        %v525 = vmul.f32 %v493, %v397
        %v526 = vmul.f32 %v494, %v398
        %v527 = vmul.f32 %v495, %v399
        %v528 = vmul.f32 %v496, %v400
        %v529 = vmul.f32 %v497, %v401
        %v530 = vmul.f32 %v498, %v402
        %v531 = vmul.f32 %v499, %v403
        %v532 = vmul.f32 %v500, %v404
        %v533 = vmul.f32 %v501, %v405
        %v534 = vmul.f32 %v502, %v406
        %v535 = vmul.f32 %v503, %v407
        %v536 = vmul.f32 %v504, %v408
        %v537 = vmul.f32 %v505, %v409
        %v538 = vmul.f32 %v506, %v410
        %v539 = vmul.f32 %v507, %v411
        %v540 = vmul.f32 %v508, %v412
        %v541 = vmul.f32 %v509, %v413
        %v542 = vmul.f32 %v510, %v414
        %v543 = vmul.f32 %v511, %v415
        %v544 = vmul.f32 %v512, %v416
        %v545 = vmul.f32 %v513, %v417
        %v546 = vmul.f32 %v514, %v418
        %v547 = vmul.f32 %v515, %v419
        %v548 = vmul.f32 %v516, %v420
        %v549 = vmul.f32 %v517, %v421
        %v550 = vmul.f32 %v518, %v422
        %v551 = vmul.f32 %v519, %v423
        %v552 = vmul.f32 %v520, %v424
        %v553 = vmul.f32 %v521, %v425
        %v554 = vmul.f32 %v522, %v426
        %v555 = vmul.f32 %v523, %v427
        %v556 = vmul.f32 %v524, 4.0
        %v557 = vmul.f32 %v525, 4.0
        %v558 = vmul.f32 %v526, 4.0
        %v559 = vmul.f32 %v527, 4.0
        %v560 = vmul.f32 %v528, 4.0
        %v561 = vmul.f32 %v529, 4.0
        %v562 = vmul.f32 %v530, 4.0
        %v563 = vmul.f32 %v531, 4.0
        %v564 = vmul.f32 %v532, 4.0
        %v565 = vmul.f32 %v533, 4.0
        %v566 = vmul.f32 %v534, 4.0
        %v567 = vmul.f32 %v535, 4.0
        %v568 = vmul.f32 %v536, 4.0
        %v569 = vmul.f32 %v537, 4.0
        %v570 = vmul.f32 %v538, 4.0
        %v571 = vmul.f32 %v539, 4.0
        %v572 = vmul.f32 %v540, 4.0
        %v573 = vmul.f32 %v541, 4.0
        %v574 = vmul.f32 %v542, 4.0
        %v575 = vmul.f32 %v543, 4.0
        %v576 = vmul.f32 %v544, 4.0
        %v577 = vmul.f32 %v545, 4.0
        %v578 = vmul.f32 %v546, 4.0
        %v579 = vmul.f32 %v547, 4.0
        %v580 = vmul.f32 %v548, 4.0
        %v581 = vmul.f32 %v549, 4.0
        %v582 = vmul.f32 %v550, 4.0
        %v583 = vmul.f32 %v551, 4.0
        %v584 = vmul.f32 %v552, 4.0
        %v585 = vmul.f32 %v553, 4.0
        %v586 = vmul.f32 %v554, 4.0
        %v587 = vmul.f32 %v555, 4.0
        %v588 = vsub.f32 %v460, %v556
        %v589 = vsub.f32 %v461, %v557
        %v590 = vsub.f32 %v462, %v558
        %v591 = vsub.f32 %v463, %v559
        %v592 = vsub.f32 %v464, %v560
        %v593 = vsub.f32 %v465, %v561
        %v594 = vsub.f32 %v466, %v562
        %v595 = vsub.f32 %v467, %v563
        %v596 = vsub.f32 %v468, %v564
        %v597 = vsub.f32 %v469, %v565
        %v598 = vsub.f32 %v470, %v566
        %v599 = vsub.f32 %v471, %v567
        %v600 = vsub.f32 %v472, %v568
        %v601 = vsub.f32 %v473, %v569
        %v602 = vsub.f32 %v474, %v570
        %v603 = vsub.f32 %v475, %v571
        %v604 = vsub.f32 %v476, %v572
        %v605 = vsub.f32 %v477, %v573
        %v606 = vsub.f32 %v478, %v574
        %v607 = vsub.f32 %v479, %v575
        %v608 = vsub.f32 %v480, %v576
        %v609 = vsub.f32 %v481, %v577
        %v610 = vsub.f32 %v482, %v578
        %v611 = vsub.f32 %v483, %v579
        %v612 = vsub.f32 %v484, %v580
        %v613 = vsub.f32 %v485, %v581
        %v614 = vsub.f32 %v486, %v582
        %v615 = vsub.f32 %v487, %v583
        %v616 = vsub.f32 %v488, %v584
        %v617 = vsub.f32 %v489, %v585
        %v618 = vsub.f32 %v490, %v586
        %v619 = vsub.f32 %v491, %v587
        %v620 = vmul.f32 %v588, 0.16666667
        %v621 = vmul.f32 %v589, 0.16666667
        %v622 = vmul.f32 %v590, 0.16666667
        %v623 = vmul.f32 %v591, 0.16666667
        %v624 = vmul.f32 %v592, 0.16666667
        %v625 = vmul.f32 %v593, 0.16666667
        %v626 = vmul.f32 %v594, 0.16666667
        %v627 = vmul.f32 %v595, 0.16666667
        %v628 = vmul.f32 %v596, 0.16666667
        %v629 = vmul.f32 %v597, 0.16666667
        %v630 = vmul.f32 %v598, 0.16666667
        %v631 = vmul.f32 %v599, 0.16666667
        %v632 = vmul.f32 %v600, 0.16666667
        %v633 = vmul.f32 %v601, 0.16666667
        %v634 = vmul.f32 %v602, 0.16666667
        %v635 = vmul.f32 %v603, 0.16666667
        %v636 = vmul.f32 %v604, 0.16666667
        %v637 = vmul.f32 %v605, 0.16666667
        %v638 = vmul.f32 %v606, 0.16666667
        %v639 = vmul.f32 %v607, 0.16666667
        %v640 = vmul.f32 %v608, 0.16666667
        %v641 = vmul.f32 %v609, 0.16666667
        %v642 = vmul.f32 %v610, 0.16666667
        %v643 = vmul.f32 %v611, 0.16666667
        %v644 = vmul.f32 %v612, 0.16666667
        %v645 = vmul.f32 %v613, 0.16666667
        %v646 = vmul.f32 %v614, 0.16666667
        %v647 = vmul.f32 %v615, 0.16666667
        %v648 = vmul.f32 %v616, 0.16666667
        %v649 = vmul.f32 %v617, 0.16666667
        %v650 = vmul.f32 %v618, 0.16666667
        %v651 = vmul.f32 %v619, 0.16666667
        %v652 = vld [vmem:[%s2] sm:$0xff]
        %vm653 = vcmask 261120
        %v655 = vsel %vm653, %v652, 0
        %657 = vmatprep.subr.mxu0 %v621
        %658 = vmatpush1.msra.mxu0 %v620
        %659 = vmatprep.subr.mxu0 %v629
        %660 = vmatpush1.msra.mxu0 %v628
        %661 = vmatprep.subr.mxu0 %v637
        %662 = vmatpush1.msra.mxu0 %v636
        %663 = vmatprep.subr.mxu0 %v645
        %664 = vmatpush1.msra.mxu0 %v644
        %665 = vmatprep.subr.mxu0 0.0
        %666 = vmatpush1.msra.mxu0 0.0
        %667 = vmatprep.subr.mxu0 0.0
        %668 = vmatpush1.msra.mxu0 0.0
        %669 = vmatprep.subr.mxu0 0.0
        %670 = vmatpush1.msra.mxu0 0.0
        %671 = vmatprep.subr.mxu0 0.0
        %672 = vmatpush1.msra.mxu0 0.0
        %673 = vmatprep.subr.mxu0 0.0
        %674 = vmatpush1.msra.mxu0 0.0
        %675 = vmatprep.subr.mxu0 0.0
        %676 = vmatpush1.msra.mxu0 0.0
        %677 = vmatprep.subr.mxu0 0.0
        %678 = vmatpush1.msra.mxu0 0.0
        %679 = vmatprep.subr.mxu0 0.0
        %680 = vmatpush1.msra.mxu0 0.0
        %681 = vmatprep.subr.mxu0 0.0
        %682 = vmatpush1.msra.mxu0 0.0
        %683 = vmatprep.subr.mxu0 0.0
        %684 = vmatpush1.msra.mxu0 0.0
        %685 = vmatprep.subr.mxu0 0.0
        %686 = vmatpush1.msra.mxu0 0.0
        %687 = vmatprep.subr.mxu0 0.0
        %688 = vmatpush1.msra.mxu0 0.0
        %689 = vmatprep.subr.mxu0 0.0
        %690 = vmatpush1.msra.mxu0 0.0
        %691 = vmatprep.subr.mxu0 0.0
        %692 = vmatpush1.msra.mxu0 0.0
        %693 = vmatprep.subr.mxu0 0.0
        %694 = vmatpush1.msra.mxu0 0.0
        %695 = vmatprep.subr.mxu0 0.0
        %696 = vmatpush1.msra.mxu0 0.0
        %697 = vmatprep.subr.mxu0 0.0
        %698 = vmatpush1.msra.mxu0 0.0
        %699 = vmatprep.subr.mxu0 0.0
        %700 = vmatpush1.msra.mxu0 0.0
        %701 = vmatprep.subr.mxu0 0.0
        %702 = vmatpush1.msra.mxu0 0.0
        %703 = vmatprep.subr.mxu0 0.0
        %704 = vmatpush1.msra.mxu0 0.0
        %705 = vmatprep.subr.mxu0 0.0
        %706 = vmatpush1.msra.mxu0 0.0
        %707 = vmatprep.subr.mxu0 0.0
        %708 = vmatpush1.msra.mxu0 0.0
        %709 = vmatprep.subr.mxu0 0.0
        %710 = vmatpush1.msra.mxu0 0.0
        %711 = vmatprep.subr.mxu0 0.0
        %712 = vmatpush1.msra.mxu0 0.0
        %713 = vmatprep.subr.mxu0 0.0
        %714 = vmatpush1.msra.mxu0 0.0
        %715 = vmatprep.subr.mxu0 0.0
        %716 = vmatpush1.msra.mxu0 0.0
        %717 = vmatprep.subr.mxu0 0.0
        %718 = vmatpush1.msra.mxu0 0.0
        %719 = vmatprep.subr.mxu0 0.0
        %720 = vmatpush1.msra.mxu0 0.0
        %721 = vmatprep.mubr.f32.mxu0 0.0
        %722 = vmatmul.mubr.f32.gmra.mrb[0].mxu0 %v655
        %v723 = vpop.f32.mrb[0].mxu0
        %v724 = vadd.f32 0.5, %v723
        %v725 = vpop.f32.mrb[0].mxu0
        %v726 = vadd.f32 0.5, %v725
        %727 = vdwg.mxu0
        %728 = vmatprep.subr.mxu0 %v623
        %729 = vmatpush1.msra.mxu0 %v622
        %730 = vmatprep.subr.mxu0 %v631
        %731 = vmatpush1.msra.mxu0 %v630
        %732 = vmatprep.subr.mxu0 %v639
        %733 = vmatpush1.msra.mxu0 %v638
        %734 = vmatprep.subr.mxu0 %v647
        %735 = vmatpush1.msra.mxu0 %v646
        %736 = vmatprep.subr.mxu0 0.0
        %737 = vmatpush1.msra.mxu0 0.0
        %738 = vmatprep.subr.mxu0 0.0
        %739 = vmatpush1.msra.mxu0 0.0
        %740 = vmatprep.subr.mxu0 0.0
        %741 = vmatpush1.msra.mxu0 0.0
        %742 = vmatprep.subr.mxu0 0.0
        %743 = vmatpush1.msra.mxu0 0.0
        %744 = vmatprep.subr.mxu0 0.0
        %745 = vmatpush1.msra.mxu0 0.0
        %746 = vmatprep.subr.mxu0 0.0
        %747 = vmatpush1.msra.mxu0 0.0
        %748 = vmatprep.subr.mxu0 0.0
        %749 = vmatpush1.msra.mxu0 0.0
        %750 = vmatprep.subr.mxu0 0.0
        %751 = vmatpush1.msra.mxu0 0.0
        %752 = vmatprep.subr.mxu0 0.0
        %753 = vmatpush1.msra.mxu0 0.0
        %754 = vmatprep.subr.mxu0 0.0
        %755 = vmatpush1.msra.mxu0 0.0
        %756 = vmatprep.subr.mxu0 0.0
        %757 = vmatpush1.msra.mxu0 0.0
        %758 = vmatprep.subr.mxu0 0.0
        %759 = vmatpush1.msra.mxu0 0.0
        %760 = vmatprep.subr.mxu0 0.0
        %761 = vmatpush1.msra.mxu0 0.0
        %762 = vmatprep.subr.mxu0 0.0
        %763 = vmatpush1.msra.mxu0 0.0
        %764 = vmatprep.subr.mxu0 0.0
        %765 = vmatpush1.msra.mxu0 0.0
        %766 = vmatprep.subr.mxu0 0.0
        %767 = vmatpush1.msra.mxu0 0.0
        %768 = vmatprep.subr.mxu0 0.0
        %769 = vmatpush1.msra.mxu0 0.0
        %770 = vmatprep.subr.mxu0 0.0
        %771 = vmatpush1.msra.mxu0 0.0
        %772 = vmatprep.subr.mxu0 0.0
        %773 = vmatpush1.msra.mxu0 0.0
        %774 = vmatprep.subr.mxu0 0.0
        %775 = vmatpush1.msra.mxu0 0.0
        %776 = vmatprep.subr.mxu0 0.0
        %777 = vmatpush1.msra.mxu0 0.0
        %778 = vmatprep.subr.mxu0 0.0
        %779 = vmatpush1.msra.mxu0 0.0
        %780 = vmatprep.subr.mxu0 0.0
        %781 = vmatpush1.msra.mxu0 0.0
        %782 = vmatprep.subr.mxu0 0.0
        %783 = vmatpush1.msra.mxu0 0.0
        %784 = vmatprep.subr.mxu0 0.0
        %785 = vmatpush1.msra.mxu0 0.0
        %786 = vmatprep.subr.mxu0 0.0
        %787 = vmatpush1.msra.mxu0 0.0
        %788 = vmatprep.subr.mxu0 0.0
        %789 = vmatpush1.msra.mxu0 0.0
        %790 = vmatprep.subr.mxu0 0.0
        %791 = vmatpush1.msra.mxu0 0.0
        %792 = vmatprep.mubr.f32.mxu0 0.0
        %793 = vmatmul.mubr.f32.gmra.mrb[0].mxu0 %v655
        %v794 = vpop.f32.mrb[0].mxu0
        %v795 = vadd.f32 0.5, %v794
        %v796 = vpop.f32.mrb[0].mxu0
        %v797 = vadd.f32 0.5, %v796
        %798 = vdwg.mxu0
        %799 = vmatprep.subr.mxu0 %v625
        %800 = vmatpush1.msra.mxu0 %v624
        %801 = vmatprep.subr.mxu0 %v633
        %802 = vmatpush1.msra.mxu0 %v632
        %803 = vmatprep.subr.mxu0 %v641
        %804 = vmatpush1.msra.mxu0 %v640
        %805 = vmatprep.subr.mxu0 %v649
        %806 = vmatpush1.msra.mxu0 %v648
        %807 = vmatprep.subr.mxu0 0.0
        %808 = vmatpush1.msra.mxu0 0.0
        %809 = vmatprep.subr.mxu0 0.0
        %810 = vmatpush1.msra.mxu0 0.0
        %811 = vmatprep.subr.mxu0 0.0
        %812 = vmatpush1.msra.mxu0 0.0
        %813 = vmatprep.subr.mxu0 0.0
        %814 = vmatpush1.msra.mxu0 0.0
        %815 = vmatprep.subr.mxu0 0.0
        %816 = vmatpush1.msra.mxu0 0.0
        %817 = vmatprep.subr.mxu0 0.0
        %818 = vmatpush1.msra.mxu0 0.0
        %819 = vmatprep.subr.mxu0 0.0
        %820 = vmatpush1.msra.mxu0 0.0
        %821 = vmatprep.subr.mxu0 0.0
        %822 = vmatpush1.msra.mxu0 0.0
        %823 = vmatprep.subr.mxu0 0.0
        %824 = vmatpush1.msra.mxu0 0.0
        %825 = vmatprep.subr.mxu0 0.0
        %826 = vmatpush1.msra.mxu0 0.0
        %827 = vmatprep.subr.mxu0 0.0
        %828 = vmatpush1.msra.mxu0 0.0
        %829 = vmatprep.subr.mxu0 0.0
        %830 = vmatpush1.msra.mxu0 0.0
        %831 = vmatprep.subr.mxu0 0.0
        %832 = vmatpush1.msra.mxu0 0.0
        %833 = vmatprep.subr.mxu0 0.0
        %834 = vmatpush1.msra.mxu0 0.0
        %835 = vmatprep.subr.mxu0 0.0
        %836 = vmatpush1.msra.mxu0 0.0
        %837 = vmatprep.subr.mxu0 0.0
        %838 = vmatpush1.msra.mxu0 0.0
        %839 = vmatprep.subr.mxu0 0.0
        %840 = vmatpush1.msra.mxu0 0.0
        %841 = vmatprep.subr.mxu0 0.0
        %842 = vmatpush1.msra.mxu0 0.0
        %843 = vmatprep.subr.mxu0 0.0
        %844 = vmatpush1.msra.mxu0 0.0
        %845 = vmatprep.subr.mxu0 0.0
        %846 = vmatpush1.msra.mxu0 0.0
        %847 = vmatprep.subr.mxu0 0.0
        %848 = vmatpush1.msra.mxu0 0.0
        %849 = vmatprep.subr.mxu0 0.0
        %850 = vmatpush1.msra.mxu0 0.0
        %851 = vmatprep.subr.mxu0 0.0
        %852 = vmatpush1.msra.mxu0 0.0
        %853 = vmatprep.subr.mxu0 0.0
        %854 = vmatpush1.msra.mxu0 0.0
        %855 = vmatprep.subr.mxu0 0.0
        %856 = vmatpush1.msra.mxu0 0.0
        %857 = vmatprep.subr.mxu0 0.0
        %858 = vmatpush1.msra.mxu0 0.0
        %859 = vmatprep.subr.mxu0 0.0
        %860 = vmatpush1.msra.mxu0 0.0
        %861 = vmatprep.subr.mxu0 0.0
        %862 = vmatpush1.msra.mxu0 0.0
        %863 = vmatprep.mubr.f32.mxu0 0.0
        %864 = vmatmul.mubr.f32.gmra.mrb[0].mxu0 %v655
        %v865 = vpop.f32.mrb[0].mxu0
        %v866 = vadd.f32 0.5, %v865
        %v867 = vpop.f32.mrb[0].mxu0
        %v868 = vadd.f32 0.5, %v867
        %869 = vdwg.mxu0
        %870 = vmatprep.subr.mxu0 %v627
        %871 = vmatpush1.msra.mxu0 %v626
        %872 = vmatprep.subr.mxu0 %v635
        %873 = vmatpush1.msra.mxu0 %v634
        %874 = vmatprep.subr.mxu0 %v643
        %875 = vmatpush1.msra.mxu0 %v642
        %876 = vmatprep.subr.mxu0 %v651
        %877 = vmatpush1.msra.mxu0 %v650
        %878 = vmatprep.subr.mxu0 0.0
        %879 = vmatpush1.msra.mxu0 0.0
        %880 = vmatprep.subr.mxu0 0.0
        %881 = vmatpush1.msra.mxu0 0.0
        %882 = vmatprep.subr.mxu0 0.0
        %883 = vmatpush1.msra.mxu0 0.0
        %884 = vmatprep.subr.mxu0 0.0
        %885 = vmatpush1.msra.mxu0 0.0
        %886 = vmatprep.subr.mxu0 0.0
        %887 = vmatpush1.msra.mxu0 0.0
        %888 = vmatprep.subr.mxu0 0.0
        %889 = vmatpush1.msra.mxu0 0.0
        %890 = vmatprep.subr.mxu0 0.0
        %891 = vmatpush1.msra.mxu0 0.0
        %892 = vmatprep.subr.mxu0 0.0
        %893 = vmatpush1.msra.mxu0 0.0
        %894 = vmatprep.subr.mxu0 0.0
        %895 = vmatpush1.msra.mxu0 0.0
        %896 = vmatprep.subr.mxu0 0.0
        %897 = vmatpush1.msra.mxu0 0.0
        %898 = vmatprep.subr.mxu0 0.0
        %899 = vmatpush1.msra.mxu0 0.0
        %900 = vmatprep.subr.mxu0 0.0
        %901 = vmatpush1.msra.mxu0 0.0
        %902 = vmatprep.subr.mxu0 0.0
        %903 = vmatpush1.msra.mxu0 0.0
        %904 = vmatprep.subr.mxu0 0.0
        %905 = vmatpush1.msra.mxu0 0.0
        %906 = vmatprep.subr.mxu0 0.0
        %907 = vmatpush1.msra.mxu0 0.0
        %908 = vmatprep.subr.mxu0 0.0
        %909 = vmatpush1.msra.mxu0 0.0
        %910 = vmatprep.subr.mxu0 0.0
        %911 = vmatpush1.msra.mxu0 0.0
        %912 = vmatprep.subr.mxu0 0.0
        %913 = vmatpush1.msra.mxu0 0.0
        %914 = vmatprep.subr.mxu0 0.0
        %915 = vmatpush1.msra.mxu0 0.0
        %916 = vmatprep.subr.mxu0 0.0
        %917 = vmatpush1.msra.mxu0 0.0
        %918 = vmatprep.subr.mxu0 0.0
        %919 = vmatpush1.msra.mxu0 0.0
        %920 = vmatprep.subr.mxu0 0.0
        %921 = vmatpush1.msra.mxu0 0.0
        %922 = vmatprep.subr.mxu0 0.0
        %923 = vmatpush1.msra.mxu0 0.0
        %924 = vmatprep.subr.mxu0 0.0
        %925 = vmatpush1.msra.mxu0 0.0
        %926 = vmatprep.subr.mxu0 0.0
        %927 = vmatpush1.msra.mxu0 0.0
        %928 = vmatprep.subr.mxu0 0.0
        %929 = vmatpush1.msra.mxu0 0.0
        %930 = vmatprep.subr.mxu0 0.0
        %931 = vmatpush1.msra.mxu0 0.0
        %932 = vmatprep.subr.mxu0 0.0
        %933 = vmatpush1.msra.mxu0 0.0
        %934 = vmatprep.mubr.f32.mxu0 0.0
        %935 = vmatmul.mubr.f32.gmra.mrb[0].mxu0 %v655
        %v936 = vpop.f32.mrb[0].mxu0
        %v937 = vadd.f32 0.5, %v936
        %v938 = vpop.f32.mrb[0].mxu0
        %v939 = vadd.f32 0.5, %v938
        %940 = vdwg.mxu0
        %941 = vst [vmem:[%s162] sm:$0xff] %v724
        %942 = vst [vmem:[%s162 + $0x8] sm:$0xff] %v726
        %943 = vst [vmem:[%s162 + $0x10] sm:$0xff] %v795
        %944 = vst [vmem:[%s162 + $0x18] sm:$0xff] %v797
        %945 = vst [vmem:[%s162 + $0x20] sm:$0xff] %v866
        %946 = vst [vmem:[%s162 + $0x28] sm:$0xff] %v868
        %947 = vst [vmem:[%s162 + $0x30] sm:$0xff] %v937
        %948 = vst [vmem:[%s162 + $0x38] sm:$0xff] %v939
        %s949 = sand.u32 %s93, 1
        %s950 = scalar_lea.sflag [#allocation3], %s949
        %s951 = sand.u32 %s93, 1
        %s952 = smul.addr %s951, 64
        %s953 = scalar_lea.vmem [#allocation2], %s952
        // Predicated region
        $region33: #{tpu_custom_call.1} parent=31 // pred_check
          %p954 = pneg %p103
        $region34: #{tpu_custom_call.1} parent=31 // pred_check_branch
          %956 = sbr.rel (%p954) target = $region36
        $region35: #{tpu_custom_call.1} parent=31 // pred_region
          %s957 = smul.u32 8, %s17
          %s959 = ssub.s32 1024, 1024
          %960 = vsyncadd %s950, %s959
          %s961 = smul.addr %s957, 128
          %s962 = scalar_lea.hbm %s3, %s961
          %s964 = sshll.u32 %s953, 4
          %s965 = int_to_ptr.vmem [resolvable:$true] %s964
          %967 = dma.vmem_to_hbm [thread:$0]  %s965, 1024, %s962, %s950
        $region36: #{tpu_custom_call.1} parent=31 // pred_fallthru
          _
      $region32: #{tpu_custom_call.1} parent=5 // pred_fallthru
        _
      %p968 = scmp.le.s32.totalorder 2, %s12
      // Predicated region
      $region37: #{tpu_custom_call.1} parent=5 // pred_check
        %p969 = pneg %p968
      $region38: #{tpu_custom_call.1} parent=5 // pred_check_branch
        %971 = sbr.rel (%p969) target = $region40
      $region39: #{tpu_custom_call.1} parent=5 // pred_region
        %s972 = ssub.s32 %s12, 2
        // Predicated region
        $region41: #{tpu_custom_call.1} parent=39 // pred_check
          %p973 = pneg %p109
        $region42: #{tpu_custom_call.1} parent=39 // pred_check_branch
          %975 = sbr.rel (%p973) target = $region44
        $region43: #{tpu_custom_call.1} parent=39 // pred_region
          %s976 = sand.u32 %s94, 1
          %s977 = scalar_lea.sflag [#allocation3], %s976
          %s978 = sand.u32 %s94, 1
          %s979 = smul.addr %s978, 64
          %s980 = scalar_lea.vmem [#allocation2], %s979
          %981 = dma.done %s977, 1024
        $region44: #{tpu_custom_call.1} parent=39 // pred_fallthru
          _
      $region40: #{tpu_custom_call.1} parent=5 // pred_fallthru
        _
    $region6: #{tpu_custom_call.1} parent=1 // loop_footer
      %s16 = sadd.s32 1, %s12
    $region7: #{tpu_custom_call.1} parent=1 // loop_footer_branch
      %11 = sbr.rel target = $region3
    $region8: #{tpu_custom_call.1} parent=1 // loop_exit
      _
    %982 = vsyncpa [#allocation3], 1
    %s983 = scalar_lea.sflag [#allocation3], 1
    %984 = vsyncpa %s983, 1

</llo_original>
